<compile_context>
chip_gen: v5e
topology: v5e:2x2
jax: 0.10.0
libtpu: 0.0.40
codegen_flags: <defaults>
</compile_context>

<pallas_src>
import functools

import jax
import jax.numpy as jnp
from jax import lax
from jax.experimental import pallas as pl
from jax.experimental.pallas import tpu as pltpu

U_DIM = 32        # latent noise width
H_DIM = 128       # hidden width (lane-dense)
N_MC = 512        # Monte-Carlo latent samples for the likelihood path
TILE_N_MAX = 2048 # max rows (lanes) per grid step on the sample path


# --------------------------------------------------------------------- utils
def _num_tensorcores():
    """TensorCores per chip; safe fallback (interpret / CPU) -> 1."""
    try:
        info = pltpu.get_tpu_info()
        for attr in ("num_cores", "core_count", "num_tensorcores"):
            v = getattr(info, attr, None)
            if isinstance(v, int) and v > 0:
                return v
    except Exception:
        pass
    return 1


def _tiling(n, n_cores):
    """Pick (tile_rows, padded_rows). Rows are the LANE dim -> 128-align."""
    n128 = ((max(int(n), 1) + 127) // 128) * 128
    if n128 <= 128:
        tile = 128
    elif n_cores >= 2 and n128 < 2 * TILE_N_MAX:
        # split into 2 steps only when a second TensorCore exists (v7x)
        tile = ((n128 // 2 + 127) // 128) * 128
    else:
        tile = min(TILE_N_MAX, n128)
    n_pad = ((n128 + tile - 1) // tile) * tile
    return tile, n_pad


def _log_sigmoid(x):
    # numerically stable log(sigmoid(x)); exp/log go to the EUP slot
    return -(jnp.maximum(-x, 0.0) + jnp.log(1.0 + jnp.exp(-jnp.abs(x))))


def _mix32(x):
    """lowbias32 integer mix on int32 (logical shifts, wrapping multiplies)."""
    x = x ^ lax.shift_right_logical(x, 16)
    x = x * jnp.int32(0x21F0AAAD)
    x = x ^ lax.shift_right_logical(x, 15)
    x = x * jnp.int32(0x735A2D97)
    x = x ^ lax.shift_right_logical(x, 15)
    return x


def _uniform_0_1(shape, row_offset, seed):
    """Counter-based U(0,1] uniforms from (global_row, col, seed) hashes."""
    rows = lax.broadcasted_iota(jnp.int32, shape, 1) + row_offset   # lane axis
    cols = lax.broadcasted_iota(jnp.int32, shape, 0)                # sublane axis
    x = _mix32(rows + seed)
    x = _mix32(x + cols)
    mant = lax.shift_right_logical(x, 9) | jnp.int32(0x3F800000)    # [1, 2)
    f = lax.bitcast_convert_type(mant, jnp.float32)
    return 2.0 - f                                                  # (0, 1]


# ---------------------------------------------------------------- sample path
def _sample_kernel(seed_ref, u_ref, w1t_ref, b1t_ref, w2t_ref, b2t_ref, out_ref):
    # u_ref: (U_DIM, tile) bf16 ; w1t: (H, U_DIM) bf16 ; b1t: (H, 1) f32
    # w2t:   (D, H)      bf16 ; b2t: (D, 1)     f32 ; out: (D, tile) f32
    h = jnp.dot(w1t_ref[...], u_ref[...],
                preferred_element_type=jnp.float32) + b1t_ref[...]
    h = jnp.maximum(h, 0.0).astype(jnp.bfloat16)
    logits = jnp.dot(w2t_ref[...], h,
                     preferred_element_type=jnp.float32) + b2t_ref[...]

    tile = out_ref.shape[1]
    r = _uniform_0_1(out_ref.shape, pl.program_id(0) * tile, seed_ref[0])
    # Bernoulli(sigmoid(logits)):  r < 1/(1+e)  <=>  r + r*e < 1   (divide-free)
    e = jnp.exp(-logits)
    out_ref[...] = (r + r * e < 1.0).astype(jnp.float32)


@functools.partial(jax.jit, static_argnames=("tile",))
def sample_pallas(seed, u_t, w1_t, b1_t, w2_t, b2_t, *, tile):
    n_pad = u_t.shape[1]
    d = w2_t.shape[0]
    grid = (n_pad // tile,)
    return pl.pallas_call(
        _sample_kernel,
        out_shape=jax.ShapeDtypeStruct((d, n_pad), jnp.float32),
        grid_spec=pltpu.PrefetchScalarGridSpec(
            num_scalar_prefetch=1,                               # seed -> SMEM
            grid=grid,
            in_specs=[
                pl.BlockSpec((U_DIM, tile), lambda i, s: (0, i)),   # U^T rows
                pl.BlockSpec((H_DIM, U_DIM), lambda i, s: (0, 0)),  # W1^T (resident)
                pl.BlockSpec((H_DIM, 1), lambda i, s: (0, 0)),      # b1^T
                pl.BlockSpec((d, H_DIM), lambda i, s: (0, 0)),      # W2^T
                pl.BlockSpec((d, 1), lambda i, s: (0, 0)),          # b2^T
            ],
            out_specs=pl.BlockSpec((d, tile), lambda i, s: (0, i)),
        ),
        compiler_params=pltpu.CompilerParams(
            dimension_semantics=("parallel",)),
    )(seed, u_t, w1_t, b1_t, w2_t, b2_t)


# ------------------------------------------------------------- likelihood path
def _loglik_kernel(u_ref, w1_ref, b1_ref, w2_ref, b2_ref, v_ref, out_ref):
    n_mc = u_ref.shape[0]
    h = jnp.dot(u_ref[...], w1_ref[...],
                preferred_element_type=jnp.float32) + b1_ref[...]
    h = jnp.maximum(h, 0.0).astype(jnp.bfloat16)
    logits = jnp.dot(h, w2_ref[...],
                     preferred_element_type=jnp.float32) + b2_ref[...]
    v = v_ref[...]                                           # (1, D), binary 0/1
    # v*logsig(x) + (1-v)*logsig(-x)  ==  logsig(x if v==1 else -x) for binary v
    ll = _log_sigmoid(jnp.where(v > 0.5, logits, -logits))
    row_ll = jnp.sum(ll, axis=-1, keepdims=True)             # (n_mc, 1)
    # fused logsumexp over the MC rows -> single (1,1) scalar output
    m = jnp.max(row_ll, axis=0, keepdims=True)               # (1, 1)
    s = jnp.sum(jnp.exp(row_ll - m), axis=0, keepdims=True)
    out_ref[...] = m + jnp.log(s) - jnp.log(jnp.float32(n_mc))


@jax.jit
def loglik_pallas(u, w1, b1, w2, b2, v_row):
    n_mc = u.shape[0]
    d = v_row.shape[1]
    # TODO(synk): if N_MC grows much larger, split the MC rows over a 2-step
    # "parallel" grid with per-step (max, sum_exp) partials for v7x's 2nd TC.
    return pl.pallas_call(
        _loglik_kernel,
        out_shape=jax.ShapeDtypeStruct((1, 1), jnp.float32),
        grid_spec=pltpu.PrefetchScalarGridSpec(
            num_scalar_prefetch=0,
            grid=(1,),                                       # all MC rows in one block
            in_specs=[
                pl.BlockSpec((n_mc, U_DIM), lambda i: (0, 0)),
                pl.BlockSpec((U_DIM, H_DIM), lambda i: (0, 0)),
                pl.BlockSpec((1, H_DIM), lambda i: (0, 0)),
                pl.BlockSpec((H_DIM, d), lambda i: (0, 0)),
                pl.BlockSpec((1, d), lambda i: (0, 0)),
                pl.BlockSpec((1, d), lambda i: (0, 0)),      # observed v
            ],
            out_specs=pl.BlockSpec((1, 1), lambda i: (0, 0)),
        ),
        compiler_params=pltpu.CompilerParams(
            dimension_semantics=("arbitrary",)),
    )(u, w1, b1, w2, b2, v_row)


class LikelihoodEstimator:
    """JAX/Pallas port of the PyTorch LikelihoodEstimator forward pass."""

    def __init__(self, v_sizes, key):
        self.v = sorted(list(v_sizes.keys()))
        self.v_sizes = dict(v_sizes)
        self.v_total_sizes = 0
        for k in self.v:
            self.v_total_sizes += self.v_sizes[k]
        d = self.v_total_sizes

        k1, k2, k3 = jax.random.split(key, 3)
        # deterministic synthetic parameters (no checkpoint load)
        self.w1 = (jax.random.normal(k1, (U_DIM, H_DIM), jnp.float32)
                   / jnp.sqrt(jnp.float32(U_DIM))).astype(jnp.bfloat16)
        self.b1 = jnp.zeros((1, H_DIM), jnp.float32)
        self.w2 = (jax.random.normal(k2, (H_DIM, d), jnp.float32)
                   / jnp.sqrt(jnp.float32(H_DIM))).astype(jnp.bfloat16)
        self.b2 = jnp.zeros((1, d), jnp.float32)
        # transposed copies for the lane-dense sample path
        self.w1_t = jnp.transpose(self.w1)                   # (H, U_DIM)
        self.b1_t = jnp.reshape(self.b1, (H_DIM, 1))         # (H, 1)
        self.w2_t = jnp.transpose(self.w2)                   # (D, H)
        self.b2_t = jnp.reshape(self.b2, (d, 1))             # (D, 1)

        self._base_key = k3
        self._call_count = 0
        self._n_cores = _num_tensorcores()

    def _next_key(self):
        self._call_count += 1
        return jax.random.fold_in(self._base_key, self._call_count)

    def forward(self, n=None, v=None):
        d = self.v_total_sizes
        if v is not None:
            # likelihood path: MC estimate of log p(v) under the latent model
            v_row = jnp.reshape(jnp.asarray(v, jnp.float32), (1, d))
            u = jax.random.normal(self._next_key(), (N_MC, U_DIM),
                                  jnp.float32).astype(jnp.bfloat16)
            logp = loglik_pallas(u, self.w1, self.b1, self.w2, self.b2,
                                 v_row)                      # (1, 1)
            return jnp.reshape(logp, (1,))

        # sampling path: n draws, split per variable (sorted-key column order)
        tile, n_pad = _tiling(n, self._n_cores)
        ku, ks = jax.random.split(self._next_key())
        # latent noise stored transposed (U_DIM, n_pad) so rows land on lanes
        u_t = jax.random.normal(ku, (U_DIM, n_pad),
                                jnp.float32).astype(jnp.bfloat16)
        seed = jax.random.randint(ks, (1,), minval=0,
                                  maxval=jnp.iinfo(jnp.int32).max,
                                  dtype=jnp.int32)
        out = sample_pallas(seed, u_t, self.w1_t, self.b1_t,
                            self.w2_t, self.b2_t, tile=tile)   # (D, n_pad)
        res = {}
        off = 0
        for k in self.v:
            sz = self.v_sizes[k]
            # wrapper-side layout plumbing: slice the lane-dense slab, transpose
            res[k] = jnp.transpose(out[off:off + sz, :n])      # (n, sz)
            off += sz
        return res

    __call__ = forward


if __name__ == "__main__":
    key = jax.random.PRNGKey(0)
    v_sizes = {"X": 1, "Z": 2, "Y": 1}          # D = 4 observed bits
    est = LikelihoodEstimator(v_sizes, key)

    # sampling path
    samples = est(n=128)
    samples = {k: jax.block_until_ready(s) for k, s in samples.items()}
    assert set(samples.keys()) == set(v_sizes.keys())
    for k in sorted(v_sizes):
        assert samples[k].shape == (128, v_sizes[k])
        assert samples[k].dtype == jnp.float32
        vals = jnp.unique(samples[k])
        assert bool(jnp.all((vals == 0.0) | (vals == 1.0)))

    # likelihood path
    v_obs = jnp.array([1.0, 0.0, 1.0, 0.0], dtype=jnp.float32)
    logp = jax.block_until_ready(est(v=v_obs))
    assert logp.shape == (1,)
    assert bool(jnp.isfinite(logp[0]))
    assert float(logp[0]) <= 0.0

    print("KERNEL_OK")
</pallas_src>

<mosaic_0001>
module attributes {stable_mosaic.version = 11 : i64} {
  func.func @_sample_kernel(%arg0: i32, %arg1: memref<1xi32, #tpu.memory_space<smem>>, %arg2: memref<32x128xbf16, #tpu.memory_space<vmem>>, %arg3: memref<128x32xbf16, #tpu.memory_space<vmem>>, %arg4: memref<128x1xf32, #tpu.memory_space<vmem>>, %arg5: memref<4x128xbf16, #tpu.memory_space<vmem>>, %arg6: memref<4x1xf32, #tpu.memory_space<vmem>>, %arg7: memref<4x128xf32, #tpu.memory_space<vmem>>) attributes {dimension_semantics = [#tpu.dimension_semantics<parallel>], iteration_bounds = array<i64: 1>, scalar_prefetch = 1 : i64, scratch_operands = 0 : i64, tpu.core_type = #tpu.core_type<tc>, window_params = [{transform_indices = @transform_0, window_bounds = array<i64: 32, 128>}, {pipeline_mode = #tpu.pipeline_mode<synchronous>, transform_indices = @transform_1, window_bounds = array<i64: 128, 32>}, {pipeline_mode = #tpu.pipeline_mode<synchronous>, transform_indices = @transform_2, window_bounds = array<i64: 128, 1>}, {pipeline_mode = #tpu.pipeline_mode<synchronous>, transform_indices = @transform_3, window_bounds = array<i64: 4, 128>}, {pipeline_mode = #tpu.pipeline_mode<synchronous>, transform_indices = @transform_4, window_bounds = array<i64: 4, 1>}, {transform_indices = @transform_5, window_bounds = array<i64: 4, 128>}]} {
    %c0 = arith.constant 0 : index
    %c0_0 = arith.constant 0 : index
    %0 = vector.load %arg3[%c0, %c0_0] : memref<128x32xbf16, #tpu.memory_space<vmem>>, vector<128x32xbf16>
    %c0_1 = arith.constant 0 : index
    %c0_2 = arith.constant 0 : index
    %1 = vector.load %arg2[%c0_1, %c0_2] : memref<32x128xbf16, #tpu.memory_space<vmem>>, vector<32x128xbf16>
    %cst = arith.constant dense<0.000000e+00> : vector<128x128xf32>
    %2 = tpu.matmul %0, %1, %cst {dimension_numbers = #tpu.dot_dimension_numbers<[1], [0], [0], [1], [0, 0, 1, 1], [], []>} : vector<128x32xbf16>, vector<32x128xbf16>, vector<128x128xf32> -> vector<128x128xf32>
    %c0_3 = arith.constant 0 : index
    %c0_4 = arith.constant 0 : index
    %3 = vector.load %arg4[%c0_3, %c0_4] : memref<128x1xf32, #tpu.memory_space<vmem>>, vector<128x1xf32>
    %4 = vector.broadcast %3 : vector<128x1xf32> to vector<128x128xf32>
    %5 = arith.addf %2, %4 : vector<128x128xf32>
    %cst_5 = arith.constant 0.000000e+00 : f32
    %6 = vector.broadcast %cst_5 : f32 to vector<128x128xf32>
    %7 = arith.maximumf %5, %6 : vector<128x128xf32>
    %8 = arith.truncf %7 : vector<128x128xf32> to vector<128x128xbf16>
    %c0_6 = arith.constant 0 : index
    %c0_7 = arith.constant 0 : index
    %9 = vector.load %arg5[%c0_6, %c0_7] : memref<4x128xbf16, #tpu.memory_space<vmem>>, vector<4x128xbf16>
    %cst_8 = arith.constant dense<0.000000e+00> : vector<4x128xf32>
    %10 = tpu.matmul %9, %8, %cst_8 {dimension_numbers = #tpu.dot_dimension_numbers<[1], [0], [0], [1], [0, 0, 1, 1], [], []>} : vector<4x128xbf16>, vector<128x128xbf16>, vector<4x128xf32> -> vector<4x128xf32>
    %c0_9 = arith.constant 0 : index
    %c0_10 = arith.constant 0 : index
    %11 = vector.load %arg6[%c0_9, %c0_10] : memref<4x1xf32, #tpu.memory_space<vmem>>, vector<4x1xf32>
    %12 = vector.broadcast %11 : vector<4x1xf32> to vector<4x128xf32>
    %13 = arith.addf %10, %12 : vector<4x128xf32>
    %c128_i32 = arith.constant 128 : i32
    %14 = arith.muli %arg0, %c128_i32 : i32
    %c0_11 = arith.constant 0 : index
    %15 = memref.load %arg1[%c0_11] : memref<1xi32, #tpu.memory_space<smem>>
    %16 = tpu.iota {dimensions = array<i32: 1>} : vector<4x128xi32>
    %17 = vector.broadcast %14 : i32 to vector<4x128xi32>
    %18 = arith.addi %16, %17 : vector<4x128xi32>
    %19 = tpu.iota {dimensions = array<i32: 0>} : vector<4x128xi32>
    %20 = vector.broadcast %15 : i32 to vector<4x128xi32>
    %21 = arith.addi %18, %20 : vector<4x128xi32>
    %c16_i32 = arith.constant 16 : i32
    %22 = vector.broadcast %c16_i32 : i32 to vector<4x128xi32>
    %23 = arith.shrui %21, %22 : vector<4x128xi32>
    %24 = arith.xori %21, %23 : vector<4x128xi32>
    %c569420461_i32 = arith.constant 569420461 : i32
    %25 = vector.broadcast %c569420461_i32 : i32 to vector<4x128xi32>
    %26 = arith.muli %24, %25 : vector<4x128xi32>
    %c15_i32 = arith.constant 15 : i32
    %27 = vector.broadcast %c15_i32 : i32 to vector<4x128xi32>
    %28 = arith.shrui %26, %27 : vector<4x128xi32>
    %29 = arith.xori %26, %28 : vector<4x128xi32>
    %c1935289751_i32 = arith.constant 1935289751 : i32
    %30 = vector.broadcast %c1935289751_i32 : i32 to vector<4x128xi32>
    %31 = arith.muli %29, %30 : vector<4x128xi32>
    %c15_i32_12 = arith.constant 15 : i32
    %32 = vector.broadcast %c15_i32_12 : i32 to vector<4x128xi32>
    %33 = arith.shrui %31, %32 : vector<4x128xi32>
    %34 = arith.xori %31, %33 : vector<4x128xi32>
    %35 = arith.addi %34, %19 : vector<4x128xi32>
    %c16_i32_13 = arith.constant 16 : i32
    %36 = vector.broadcast %c16_i32_13 : i32 to vector<4x128xi32>
    %37 = arith.shrui %35, %36 : vector<4x128xi32>
    %38 = arith.xori %35, %37 : vector<4x128xi32>
    %c569420461_i32_14 = arith.constant 569420461 : i32
    %39 = vector.broadcast %c569420461_i32_14 : i32 to vector<4x128xi32>
    %40 = arith.muli %38, %39 : vector<4x128xi32>
    %c15_i32_15 = arith.constant 15 : i32
    %41 = vector.broadcast %c15_i32_15 : i32 to vector<4x128xi32>
    %42 = arith.shrui %40, %41 : vector<4x128xi32>
    %43 = arith.xori %40, %42 : vector<4x128xi32>
    %c1935289751_i32_16 = arith.constant 1935289751 : i32
    %44 = vector.broadcast %c1935289751_i32_16 : i32 to vector<4x128xi32>
    %45 = arith.muli %43, %44 : vector<4x128xi32>
    %c15_i32_17 = arith.constant 15 : i32
    %46 = vector.broadcast %c15_i32_17 : i32 to vector<4x128xi32>
    %47 = arith.shrui %45, %46 : vector<4x128xi32>
    %48 = arith.xori %45, %47 : vector<4x128xi32>
    %c9_i32 = arith.constant 9 : i32
    %49 = vector.broadcast %c9_i32 : i32 to vector<4x128xi32>
    %50 = arith.shrui %48, %49 : vector<4x128xi32>
    %c1065353216_i32 = arith.constant 1065353216 : i32
    %51 = vector.broadcast %c1065353216_i32 : i32 to vector<4x128xi32>
    %52 = arith.ori %50, %51 : vector<4x128xi32>
    %53 = tpu.bitcast %52 : vector<4x128xi32> -> vector<4x128xf32>
    %cst_18 = arith.constant 2.000000e+00 : f32
    %54 = vector.broadcast %cst_18 : f32 to vector<4x128xf32>
    %55 = arith.subf %54, %53 : vector<4x128xf32>
    %cst_19 = arith.constant 0.000000e+00 : f32
    %56 = vector.broadcast %cst_19 : f32 to vector<4x128xf32>
    %57 = arith.subf %56, %13 : vector<4x128xf32>
    %58 = math.exp %57 : vector<4x128xf32>
    %59 = arith.mulf %55, %58 : vector<4x128xf32>
    %60 = arith.addf %55, %59 : vector<4x128xf32>
    %cst_20 = arith.constant 1.000000e+00 : f32
    %61 = vector.broadcast %cst_20 : f32 to vector<4x128xf32>
    %62 = arith.cmpf olt, %60, %61 : vector<4x128xf32>
    %63 = arith.extui %62 : vector<4x128xi1> to vector<4x128xi32>
    %64 = arith.sitofp %63 : vector<4x128xi32> to vector<4x128xf32>
    %c0_21 = arith.constant 0 : index
    %c0_22 = arith.constant 0 : index
    %65 = vector.load %arg7[%c0_21, %c0_22] : memref<4x128xf32, #tpu.memory_space<vmem>>, vector<4x128xf32>
    tpu.vector_store %arg7[%c0_21, %c0_22], %64 {strides = array<i32>} : memref<4x128xf32, #tpu.memory_space<vmem>>, vector<4x128xf32>,
    return
  }
  func.func @transform_0(%arg0: i32, %arg1: memref<1xi32, #tpu.memory_space<smem>>) -> (i32, i32) {
    %c0_i32 = arith.constant 0 : i32
    %c0_i32_0 = arith.constant 0 : i32
    return %c0_i32, %arg0 : i32, i32
  }
  func.func @transform_1(%arg0: i32, %arg1: memref<1xi32, #tpu.memory_space<smem>>) -> (i32, i32) {
    %c0_i32 = arith.constant 0 : i32
    %c0_i32_0 = arith.constant 0 : i32
    %c0_i32_1 = arith.constant 0 : i32
    return %c0_i32, %c0_i32_0 : i32, i32
  }
  func.func @transform_2(%arg0: i32, %arg1: memref<1xi32, #tpu.memory_space<smem>>) -> (i32, i32) {
    %c0_i32 = arith.constant 0 : i32
    %c0_i32_0 = arith.constant 0 : i32
    %c0_i32_1 = arith.constant 0 : i32
    return %c0_i32, %c0_i32_0 : i32, i32
  }
  func.func @transform_3(%arg0: i32, %arg1: memref<1xi32, #tpu.memory_space<smem>>) -> (i32, i32) {
    %c0_i32 = arith.constant 0 : i32
    %c0_i32_0 = arith.constant 0 : i32
    %c0_i32_1 = arith.constant 0 : i32
    return %c0_i32, %c0_i32_0 : i32, i32
  }
  func.func @transform_4(%arg0: i32, %arg1: memref<1xi32, #tpu.memory_space<smem>>) -> (i32, i32) {
    %c0_i32 = arith.constant 0 : i32
    %c0_i32_0 = arith.constant 0 : i32
    %c0_i32_1 = arith.constant 0 : i32
    return %c0_i32, %c0_i32_0 : i32, i32
  }
  func.func @transform_5(%arg0: i32, %arg1: memref<1xi32, #tpu.memory_space<smem>>) -> (i32, i32) {
    %c0_i32 = arith.constant 0 : i32
    %c0_i32_0 = arith.constant 0 : i32
    return %c0_i32, %arg0 : i32, i32
  }
}

</mosaic_0001>

<llo_original>
// kernel: sample_pallas.1
$region0: #{sample_pallas.1}
  #allocation0 [shape = 'u32[]', space=smem, size = 0x4, offset = 0x4, fixed_abs, tag = 'smem constant byte address 0x4 - core index']
  #allocation1 [shape = 'u32[72,128]{1,0:T(1,128)}', space=vmem, size = 0x9000, scoped, tag = 'internal scratch']
  #allocation2 [shape = 's32[1]{0}', space=sflag, size = 0x4, scoped, tag = 'scoped memory for sample_pallas.1']
  #allocation3 [shape = 's32[1]{0:T(128)S(6)}', space=smem, size = 0x200, scoped, tag = 'prefetched SMEM operand 0']
  %s0 = inlined_call_operand.<no memory space> [shape: s32[1], index: 0, kind: input, shape index: {}]
  %s1 = inlined_call_operand.vmem [shape: bf16[32,128], index: 1, kind: input, shape index: {}]
  %s2 = inlined_call_operand.vmem [shape: bf16[128,32], index: 2, kind: input, shape index: {}]
  %s3 = inlined_call_operand.vmem [shape: f32[128,1], index: 3, kind: input, shape index: {}]
  %s4 = inlined_call_operand.vmem [shape: bf16[4,128], index: 4, kind: input, shape index: {}]
  %s5 = inlined_call_operand.vmem [shape: f32[4,1], index: 5, kind: input, shape index: {}]
  %s6 = inlined_call_operand.hbm [shape: f32[4,128], index: 6, kind: output, shape index: {}]
  %s7 = sld [smem:[#allocation0]]
  $region30: #{sample_pallas.1} parent=0
    _
  %s9 = ssub.s32 1, %s7
  %s10 = scalar_select 0, %s9, %s7
  %11 = sst [smem:[#allocation3]] %s0
  $region1: #{sample_pallas.1} parent=0
    #allocation4 [shape = 'u8[2048]{0}', space=vmem, size = 0x800, scoped, tag = 'output window, operand 0, single buffered']
    #allocation5 [shape = 's32[1]{0}', space=sflag, size = 0x4, scoped, tag = 'scoped memory for sample_pallas.1']
    %12 = vsyncpa [#allocation5], 0
    // Predicated region
    $region2: #{sample_pallas.1} parent=1 // pred_check
      _
    $region3: #{sample_pallas.1} parent=1 // pred_check_branch
      %14 = sbr.rel (0) target = $region5
    $region4: #{sample_pallas.1} parent=1 // pred_region
      _
    $region5: #{sample_pallas.1} parent=1 // pred_fallthru
      _
    // Predicated region
    $region6: #{sample_pallas.1} parent=1 // pred_check
      _
    $region7: #{sample_pallas.1} parent=1 // pred_check_branch
      %16 = sbr.rel (0) target = $region9
    $region8: #{sample_pallas.1} parent=1 // pred_region
      _
    $region9: #{sample_pallas.1} parent=1 // pred_fallthru
      _
    // Predicated region
    $region10: #{sample_pallas.1} parent=1 // pred_check
      _
    $region11: #{sample_pallas.1} parent=1 // pred_check_branch
      %18 = sbr.rel (0) target = $region13
    $region12: #{sample_pallas.1} parent=1 // pred_region
      _
    $region13: #{sample_pallas.1} parent=1 // pred_fallthru
      _
    // Predicated region
    $region14: #{sample_pallas.1} parent=1 // pred_check
      _
    $region15: #{sample_pallas.1} parent=1 // pred_check_branch
      %20 = sbr.rel (0) target = $region17
    $region16: #{sample_pallas.1} parent=1 // pred_region
      _
    $region17: #{sample_pallas.1} parent=1 // pred_fallthru
      _
    // Predicated region
    $region18: #{sample_pallas.1} parent=1 // pred_check
      _
    $region19: #{sample_pallas.1} parent=1 // pred_check_branch
      %22 = sbr.rel (0) target = $region21
    $region20: #{sample_pallas.1} parent=1 // pred_region
      _
    $region21: #{sample_pallas.1} parent=1 // pred_fallthru
      _
    %v24 = vld [vmem:[%s2] sm:$0xf]
    %v25 = vld [vmem:[%s2 + $0x4] sm:$0xf]
    %v26 = vld [vmem:[%s2 + $0x8] sm:$0xf]
    %v27 = vld [vmem:[%s2 + $0xc] sm:$0xf]
    %v28 = vld [vmem:[%s2 + $0x10] sm:$0xf]
    %v29 = vld [vmem:[%s2 + $0x14] sm:$0xf]
    %v30 = vld [vmem:[%s2 + $0x18] sm:$0xf]
    %v31 = vld [vmem:[%s2 + $0x1c] sm:$0xf]
    %v32 = vld [vmem:[%s2 + $0x20] sm:$0xf]
    %v33 = vld [vmem:[%s2 + $0x24] sm:$0xf]
    %v34 = vld [vmem:[%s2 + $0x28] sm:$0xf]
    %v35 = vld [vmem:[%s2 + $0x2c] sm:$0xf]
    %v36 = vld [vmem:[%s2 + $0x30] sm:$0xf]
    %v37 = vld [vmem:[%s2 + $0x34] sm:$0xf]
    %v38 = vld [vmem:[%s2 + $0x38] sm:$0xf]
    %v39 = vld [vmem:[%s2 + $0x3c] sm:$0xf]
    %v40 = vld [vmem:[%s1] sm:$0xf]
    %v41 = vld [vmem:[%s1 + $0x4] sm:$0xf]
    %v42 = vld [vmem:[%s1 + $0x8] sm:$0xf]
    %v43 = vld [vmem:[%s1 + $0xc] sm:$0xf]
    %v44 = vld [vmem:[%s3] sm:$0xff]
    %v45 = vld [vmem:[%s3 + $0x8] sm:$0xff]
    %v46 = vld [vmem:[%s3 + $0x10] sm:$0xff]
    %v47 = vld [vmem:[%s3 + $0x18] sm:$0xff]
    %v48 = vld [vmem:[%s3 + $0x20] sm:$0xff]
    %v49 = vld [vmem:[%s3 + $0x28] sm:$0xff]
    %v50 = vld [vmem:[%s3 + $0x30] sm:$0xff]
    %v51 = vld [vmem:[%s3 + $0x38] sm:$0xff]
    %v52 = vld [vmem:[%s3 + $0x40] sm:$0xff]
    %v53 = vld [vmem:[%s3 + $0x48] sm:$0xff]
    %v54 = vld [vmem:[%s3 + $0x50] sm:$0xff]
    %v55 = vld [vmem:[%s3 + $0x58] sm:$0xff]
    %v56 = vld [vmem:[%s3 + $0x60] sm:$0xff]
    %v57 = vld [vmem:[%s3 + $0x68] sm:$0xff]
    %v58 = vld [vmem:[%s3 + $0x70] sm:$0xff]
    %v59 = vld [vmem:[%s3 + $0x78] sm:$0xff]
    %61 = vset.pattern.permute.xlu0 0
    %62 = vperm.xlu0 %61, %v44
    %v63 = vpop.permute.xlu0 %62
    %66 = vset.pattern.permute.xlu0 0
    %67 = vperm.xlu0 %66, %v45
    %v68 = vpop.permute.xlu0 %67
    %71 = vset.pattern.permute.xlu0 0
    %72 = vperm.xlu0 %71, %v46
    %v73 = vpop.permute.xlu0 %72
    %76 = vset.pattern.permute.xlu0 0
    %77 = vperm.xlu0 %76, %v47
    %v78 = vpop.permute.xlu0 %77
    %81 = vset.pattern.permute.xlu0 0
    %82 = vperm.xlu0 %81, %v48
    %v83 = vpop.permute.xlu0 %82
    %86 = vset.pattern.permute.xlu0 0
    %87 = vperm.xlu0 %86, %v49
    %v88 = vpop.permute.xlu0 %87
    %91 = vset.pattern.permute.xlu0 0
    %92 = vperm.xlu0 %91, %v50
    %v93 = vpop.permute.xlu0 %92
    %96 = vset.pattern.permute.xlu0 0
    %97 = vperm.xlu0 %96, %v51
    %v98 = vpop.permute.xlu0 %97
    %101 = vset.pattern.permute.xlu0 0
    %102 = vperm.xlu0 %101, %v52
    %v103 = vpop.permute.xlu0 %102
    %106 = vset.pattern.permute.xlu0 0
    %107 = vperm.xlu0 %106, %v53
    %v108 = vpop.permute.xlu0 %107
    %111 = vset.pattern.permute.xlu0 0
    %112 = vperm.xlu0 %111, %v54
    %v113 = vpop.permute.xlu0 %112
    %116 = vset.pattern.permute.xlu0 0
    %117 = vperm.xlu0 %116, %v55
    %v118 = vpop.permute.xlu0 %117
    %121 = vset.pattern.permute.xlu0 0
    %122 = vperm.xlu0 %121, %v56
    %v123 = vpop.permute.xlu0 %122
    %126 = vset.pattern.permute.xlu0 0
    %127 = vperm.xlu0 %126, %v57
    %v128 = vpop.permute.xlu0 %127
    %131 = vset.pattern.permute.xlu0 0
    %132 = vperm.xlu0 %131, %v58
    %v133 = vpop.permute.xlu0 %132
    %136 = vset.pattern.permute.xlu0 0
    %137 = vperm.xlu0 %136, %v59
    %v138 = vpop.permute.xlu0 %137
    %v156 = vunpack.c.l.b16 %v24
    %v157 = vunpack.c.l.b16 %v25
    %v158 = vunpack.c.l.b16 %v26
    %v159 = vunpack.c.l.b16 %v27
    %v160 = vunpack.c.l.b16 %v28
    %v161 = vunpack.c.l.b16 %v29
    %v162 = vunpack.c.l.b16 %v30
    %v163 = vunpack.c.l.b16 %v31
    %v164 = vunpack.c.l.b16 %v32
    %v165 = vunpack.c.l.b16 %v33
    %v166 = vunpack.c.l.b16 %v34
    %v167 = vunpack.c.l.b16 %v35
    %v168 = vunpack.c.l.b16 %v36
    %v169 = vunpack.c.l.b16 %v37
    %v170 = vunpack.c.l.b16 %v38
    %v171 = vunpack.c.l.b16 %v39
    %v172 = vpack.c.b16 %v157, %v156
    %v173 = vpack.c.b16 %v159, %v158
    %v174 = vpack.c.b16 %v161, %v160
    %v175 = vpack.c.b16 %v163, %v162
    %v176 = vpack.c.b16 %v165, %v164
    %v177 = vpack.c.b16 %v167, %v166
    %v178 = vpack.c.b16 %v169, %v168
    %v179 = vpack.c.b16 %v171, %v170
    %v184 = vunpack.c.l.b16 %v40
    %v185 = vunpack.c.l.b16 %v41
    %v186 = vunpack.c.l.b16 %v42
    %v187 = vunpack.c.l.b16 %v43
    %v188 = vpack.c.b16 %v185, %v184
    %v189 = vpack.c.b16 %v187, %v186
    %vm192 = vcmask 261120
    %v194 = vsel %vm192, %v172, 0
    %v197 = vsel %vm192, %v173, 0
    %v200 = vsel %vm192, %v174, 0
    %v203 = vsel %vm192, %v175, 0
    %v206 = vsel %vm192, %v176, 0
    %v209 = vsel %vm192, %v177, 0
    %v212 = vsel %vm192, %v178, 0
    %v215 = vsel %vm192, %v179, 0
    %217 = vmatpush.bf16.msra.mxu0 0
    %218 = vmatpush.bf16.msra.mxu0 0
    %219 = vmatpush.bf16.msra.mxu0 0
    %220 = vmatpush.bf16.msra.mxu0 0
    %221 = vmatpush.bf16.msra.mxu0 0
    %222 = vmatpush.bf16.msra.mxu0 0
    %223 = vmatpush.bf16.msra.mxu0 %v189
    %224 = vmatpush.bf16.msra.mxu0 %v188
    %225 = vmatmul.bf16.gmra.mxu0 %v194
    %v226 = vpop.f32.mrf.mxu0
    %v227 = vadd.f32 %v63, %v226
    %v228 = vpop.f32.mrf.mxu0
    %v229 = vadd.f32 %v68, %v228
    %230 = vmatmul.bf16.gmra.mxu0 %v197
    %v231 = vpop.f32.mrf.mxu0
    %v232 = vadd.f32 %v73, %v231
    %v233 = vpop.f32.mrf.mxu0
    %v234 = vadd.f32 %v78, %v233
    %235 = vmatmul.bf16.gmra.mxu0 %v200
    %v236 = vpop.f32.mrf.mxu0
    %v237 = vadd.f32 %v83, %v236
    %v238 = vpop.f32.mrf.mxu0
    %v239 = vadd.f32 %v88, %v238
    %240 = vmatmul.bf16.gmra.mxu0 %v203
    %v241 = vpop.f32.mrf.mxu0
    %v242 = vadd.f32 %v93, %v241
    %v243 = vpop.f32.mrf.mxu0
    %v244 = vadd.f32 %v98, %v243
    %245 = vmatmul.bf16.gmra.mxu0 %v206
    %v246 = vpop.f32.mrf.mxu0
    %v247 = vadd.f32 %v103, %v246
    %v248 = vpop.f32.mrf.mxu0
    %v249 = vadd.f32 %v108, %v248
    %250 = vmatmul.bf16.gmra.mxu0 %v209
    %v251 = vpop.f32.mrf.mxu0
    %v252 = vadd.f32 %v113, %v251
    %v253 = vpop.f32.mrf.mxu0
    %v254 = vadd.f32 %v118, %v253
    %255 = vmatmul.bf16.gmra.mxu0 %v212
    %v256 = vpop.f32.mrf.mxu0
    %v257 = vadd.f32 %v123, %v256
    %v258 = vpop.f32.mrf.mxu0
    %v259 = vadd.f32 %v128, %v258
    %260 = vmatmul.bf16.gmra.mxu0 %v215
    %v261 = vpop.f32.mrf.mxu0
    %v262 = vadd.f32 %v133, %v261
    %v263 = vpop.f32.mrf.mxu0
    %v264 = vadd.f32 %v138, %v263
    %265 = vdwg.mxu0
    %v266 = vmax.f32 %v227, 0.0
    %v267 = vmax.f32 %v229, 0.0
    %v268 = vmax.f32 %v232, 0.0
    %v269 = vmax.f32 %v234, 0.0
    %v270 = vmax.f32 %v237, 0.0
    %v271 = vmax.f32 %v239, 0.0
    %v272 = vmax.f32 %v242, 0.0
    %v273 = vmax.f32 %v244, 0.0
    %v274 = vmax.f32 %v247, 0.0
    %v275 = vmax.f32 %v249, 0.0
    %v276 = vmax.f32 %v252, 0.0
    %v277 = vmax.f32 %v254, 0.0
    %v278 = vmax.f32 %v257, 0.0
    %v279 = vmax.f32 %v259, 0.0
    %v280 = vmax.f32 %v262, 0.0
    %v281 = vmax.f32 %v264, 0.0
    %v282 = vpack.c.bf16 %v267, %v266
    %v283 = vpack.c.bf16 %v269, %v268
    %v284 = vpack.c.bf16 %v271, %v270
    %v285 = vpack.c.bf16 %v273, %v272
    %v286 = vpack.c.bf16 %v275, %v274
    %v287 = vpack.c.bf16 %v277, %v276
    %v288 = vpack.c.bf16 %v279, %v278
    %v289 = vpack.c.bf16 %v281, %v280
    %v290 = vld [vmem:[%s4] sm:$0x3]
    %v291 = vld [vmem:[%s5] sm:$0xf]
    %293 = vset.pattern.permute.xlu0 0
    %294 = vperm.xlu0 %293, %v291
    %v295 = vpop.permute.xlu0 %294
    %297 = vmatpush.bf16.msra.mxu0 %v289
    %298 = vmatpush.bf16.msra.mxu0 %v288
    %299 = vmatpush.bf16.msra.mxu0 %v287
    %300 = vmatpush.bf16.msra.mxu0 %v286
    %301 = vmatpush.bf16.msra.mxu0 %v285
    %302 = vmatpush.bf16.msra.mxu0 %v284
    %303 = vmatpush.bf16.msra.mxu0 %v283
    %304 = vmatpush.bf16.msra.mxu0 %v282
    %305 = vmatmul.bf16.gmra.mxu0 %v290
    %v306 = vpop.f32.mrf.mxu0
    %v307 = vadd.f32 %v295, %v306
    %v308 = vpop.f32.mrf.mxu0
    %309 = vdwg.mxu0
    %s310 = smul.u32 0, 128
    %s311 = sld [smem:[#allocation3]]
    %v312 = vlaneseq
    %v313 = vand.u32 %v312, 127
    %v314 = vstv %s310
    %v315 = vadd.s32 %v313, %v314
    %v316 = vlaneseq
    %v317 = vshrl.u32 %v316, 7
    %v318 = vstv %s311
    %v319 = vadd.s32 %v315, %v318
    %v320 = vshrl.u32 %v319, 16
    %v321 = vxor.u32 %v319, %v320
    %v322 = vmul.u32 %v321, 569420461
    %v323 = vshrl.u32 %v322, 15
    %v324 = vxor.u32 %v322, %v323
    %v325 = vmul.u32 %v324, 1935289751
    %v326 = vshrl.u32 %v325, 15
    %v327 = vxor.u32 %v325, %v326
    %v328 = vadd.s32 %v327, %v317
    %v329 = vshrl.u32 %v328, 16
    %v330 = vxor.u32 %v328, %v329
    %v331 = vmul.u32 %v330, 569420461
    %v332 = vshrl.u32 %v331, 15
    %v333 = vxor.u32 %v331, %v332
    %v334 = vmul.u32 %v333, 1935289751
    %v335 = vshrl.u32 %v334, 15
    %v336 = vxor.u32 %v334, %v335
    %v337 = vshrl.u32 %v336, 9
    %v338 = vor.u32 %v337, 1065353216
    %v340 = vsub.f32 2.0, %v338
    %v341 = vsub.f32 0.0, %v307
    %v342 = vmul.f32 %v341, 1.442695
    %v343 = vpow.pop %v342
    %v344 = vmul.f32 %v340, %v343
    %v345 = vadd.f32 %v340, %v344
    %vm346 = vcmp.lt.f32.partialorder %v345, 1.0
    %v347 = vsel %vm346, 1, 0
    %v348 = vcvt.s32.f32 %v347
    %349 = vst [vmem:[#allocation4] sm:$0xf] %v348
    // Predicated region
    $region22: #{sample_pallas.1} parent=1 // pred_check
      _
    $region23: #{sample_pallas.1} parent=1 // pred_check_branch
      %351 = sbr.rel (0) target = $region25
    $region24: #{sample_pallas.1} parent=1 // pred_region
      %353 = vsyncadd [#allocation5], 0
      %s355 = sshll.u32 [#allocation4], 4
      %s356 = int_to_ptr.vmem [resolvable:$true] %s355
      %s357 = sshll.u32 %s6, 4
      %s358 = int_to_ptr.hbm [resolvable:$true] %s357
      %360 = dma.vmem_to_hbm [thread:$0]  %s356, 64, %s358, [#allocation5]
    $region25: #{sample_pallas.1} parent=1 // pred_fallthru
      _
    // Predicated region
    $region26: #{sample_pallas.1} parent=1 // pred_check
      _
    $region27: #{sample_pallas.1} parent=1 // pred_check_branch
      %362 = sbr.rel (0) target = $region29
    $region28: #{sample_pallas.1} parent=1 // pred_region
      %364 = dma.done [#allocation5], 64
    $region29: #{sample_pallas.1} parent=1 // pred_fallthru
      _
    %365 = vsyncpa [#allocation5], 1

</llo_original>
